<compile_context>
chip_gen: v5e
topology: v5e:2x2
jax: 0.10.0
libtpu: 0.0.40
codegen_flags: <defaults>
</compile_context>

<pallas_src>
import jax
import jax.numpy as jnp
from jax import lax
from jax.experimental import pallas as pl
from jax.experimental.pallas import tpu as pltpu

D_IN = 4            # raw node feature dim
D_HID = 32          # hidden / embedding dim
NQ = 8              # query graph nodes
NT = 16             # target graph nodes
N_TOT = NQ + NT     # stacked (block-diagonal) node count = 24
K = 8               # number of candidate target nodes in v_li
B = 8               # batched candidate (u, v_li) evaluations per launch

X_COL = 32          # column offset of node features inside the graph slab
G_COLS = 128        # lane-dense graph slab width
P_ROWS = 40         # parameter slab rows (multiple of 8)
P_COLS = 128        # lane-dense parameter slab width
OUT_ROWS = 8        # == K (policy scores live in column 0)
OUT_COLS = 128
SEL_ROWS = 2 + K    # selection matrix rows: [one-hot(u); mean-pool; one-hot(v_i)]


# ------------------------------ fused DVN kernel --------------------------------
def dvn_kernel(u_ref, v_ref,        # scalar prefetch (SMEM): (B,), (B, K) int32
               g_ref, p_ref,        # VMEM: graph slab (24,128), param slab (40,128)
               out_ref):            # VMEM: (8,128) output slab for this candidate
    b = pl.program_id(0)

    # ---- unpack parameter slab with static slices (zero runtime cost) ----
    w_pre = p_ref[0:D_IN, 0:D_HID]                       # (4, 32)
    b_pre = p_ref[4:5, 0:D_HID]                          # (1, 32)
    b_gnn = p_ref[4:5, D_HID:2 * D_HID]                  # (1, 32)
    gamma_q = p_ref[4:5, 2 * D_HID:3 * D_HID]            # (1, 32)  norm_li[2]
    beta_q = p_ref[4:5, 3 * D_HID:4 * D_HID]             # (1, 32)
    b1 = p_ref[5:6, 0:D_HID]                             # (1, 32)
    w2_row = p_ref[5:6, D_HID:2 * D_HID]                 # w2^T, (1, 32)
    gamma_t = p_ref[5:6, 2 * D_HID:3 * D_HID]            # (1, 32)  norm_li[3]
    beta_t = p_ref[5:6, 3 * D_HID:4 * D_HID]             # (1, 32)
    b2 = p_ref[6:7, 0:1]                                 # (1, 1)
    w_gnn = p_ref[8:8 + D_HID, 0:D_HID]                  # (32, 32)
    w1 = p_ref[8:8 + D_HID, D_HID:2 * D_HID]             # (32, 32)
    w_bil = p_ref[8:8 + D_HID, 2 * D_HID:4 * D_HID]      # (32, 64)

    # ---- fused encoder on the block-diagonal graph slab (Xq stacked over Xt) --
    a = g_ref[0:N_TOT, 0:N_TOT]                          # block-diag normalized adj
    x = g_ref[0:N_TOT, X_COL:X_COL + D_IN]               # stacked node features
    # pre_encoder: H0 = relu(X @ Wpre + b)
    h0 = jnp.maximum(
        jnp.dot(x, w_pre, preferred_element_type=jnp.float32) + b_pre, 0.0)
    # encoder: GCN-style message passing with degree-normalized adjacency
    agg = jnp.dot(a, h0, preferred_element_type=jnp.float32)
    h = jnp.maximum(
        jnp.dot(agg, w_gnn, preferred_element_type=jnp.float32) + b_gnn, 0.0)
    # norm_li[2]/[3]: row-wise LayerNorm (fusion-safe); per-graph affine params
    mu = jnp.mean(h, axis=-1, keepdims=True)
    var = jnp.mean(jnp.square(h - mu), axis=-1, keepdims=True)
    hn = (h - mu) * lax.rsqrt(var + 1e-5)
    node_row = lax.broadcasted_iota(jnp.int32, (N_TOT, 1), 0)
    is_q = node_row < NQ
    h = hn * jnp.where(is_q, gamma_q, gamma_t) + jnp.where(is_q, beta_q, beta_t)

    # ---- one-hot selection matmul: [Hq[u]; mean(Hq); Ht[v_0..v_{K-1}]] = S @ H --
    row_ids = lax.broadcasted_iota(jnp.int32, (SEL_ROWS, N_TOT), 0)
    col_ids = lax.broadcasted_iota(jnp.int32, (SEL_ROWS, N_TOT), 1)
    ridx = lax.broadcasted_iota(jnp.int32, (SEL_ROWS, 1), 0)
    tgt = jnp.where(ridx == 0, u_ref[b], jnp.full((SEL_ROWS, 1), -1, jnp.int32))
    for i in range(K):                                   # VPU-only, no dyn slices
        tgt = jnp.where(ridx == 2 + i, v_ref[b, i] + NQ, tgt)
    sel = jnp.where(col_ids == tgt, 1.0, 0.0)
    sel = sel + jnp.where((row_ids == 1) & (col_ids < NQ), 1.0 / NQ, 0.0)
    sel_h = jnp.dot(sel, h, preferred_element_type=jnp.float32)  # (SEL_ROWS, 32)

    xu = sel_h[0:1, :]                                   # Hq[u]       (1, 32)
    g_emb = sel_h[1:2, :]                                # mean(Hq)    (1, 32)
    hv = sel_h[2:2 + K, :]                               # Ht[v_li]    (K, 32)

    # ---- decoder_value: 2-layer MLP on pooled graph embedding ----
    z = jnp.maximum(
        jnp.dot(g_emb, w1, preferred_element_type=jnp.float32) + b1, 0.0)
    out_value = jnp.sum(z * w2_row, axis=-1, keepdims=True) + b2   # (1, 1)

    # ---- decoder_policy: bilinear([Hq[u] ++ g_emb], Ht[v]) without the concat --
    proj = jnp.dot(hv, w_bil, preferred_element_type=jnp.float32)  # (K, 64)
    scores = (jnp.sum(proj[:, 0:D_HID] * xu, axis=-1, keepdims=True)
              + jnp.sum(proj[:, D_HID:2 * D_HID] * g_emb, axis=-1, keepdims=True))

    # ---- compose the (8, 128) output slab in registers: ONE unmasked store ----
    r = lax.broadcasted_iota(jnp.int32, (OUT_ROWS, OUT_COLS), 0)
    c = lax.broadcasted_iota(jnp.int32, (OUT_ROWS, OUT_COLS), 1)
    slab = jnp.where(c == 0, scores, 0.0)                # policy in column 0
    slab = slab + jnp.where((r == 0) & (c == 1), out_value, 0.0)   # value at [0,1]
    out_ref[...] = slab


# --------------------------------- DVN forward ----------------------------------
def dvn_forward(graph_slab, param_slab, u_arr, v_arr):
    # TODO(synk): gq/gt edge-attribute encoders (PyG edge_attr MLPs) have no
    # dense-node-tensor equivalent here; treated as identity.
    nb = u_arr.shape[0]
    slab = pl.pallas_call(
        dvn_kernel,
        out_shape=jax.ShapeDtypeStruct((nb * OUT_ROWS, OUT_COLS), jnp.float32),
        grid_spec=pltpu.PrefetchScalarGridSpec(
            num_scalar_prefetch=2,                        # u, v_li -> SMEM
            grid=(nb,),
            in_specs=[
                pl.BlockSpec((N_TOT, G_COLS), lambda i, u, v: (0, 0)),   # graph slab
                pl.BlockSpec((P_ROWS, P_COLS), lambda i, u, v: (0, 0)),  # param slab
            ],
            out_specs=pl.BlockSpec((OUT_ROWS, OUT_COLS), lambda i, u, v: (i, 0)),
        ),
        compiler_params=pltpu.CompilerParams(dimension_semantics=("parallel",)),
    )(u_arr.astype(jnp.int32), v_arr.astype(jnp.int32), graph_slab, param_slab)

    slab = slab.reshape(nb, OUT_ROWS, OUT_COLS)
    out_policy = slab[:, 0:K, 0:1]       # (B, K, 1) policy scores per candidate
    out_value = slab[:, 0:1, 1:2]        # (B, 1, 1) value per candidate
    return out_policy, out_value


dvn_forward_jit = jax.jit(dvn_forward)


# ---------------------------- parameter / graph packing -------------------------
def init_params(key):
    ks = jax.random.split(key, 12)
    s = 0.1
    return dict(
        w_pre=s * jax.random.normal(ks[0], (D_IN, D_HID), jnp.float32),
        b_pre=s * jax.random.normal(ks[1], (D_HID,), jnp.float32),
        w_gnn=s * jax.random.normal(ks[2], (D_HID, D_HID), jnp.float32),
        b_gnn=s * jax.random.normal(ks[3], (D_HID,), jnp.float32),
        gamma_q=1.0 + s * jax.random.normal(ks[4], (D_HID,), jnp.float32),
        beta_q=s * jax.random.normal(ks[5], (D_HID,), jnp.float32),
        gamma_t=1.0 + s * jax.random.normal(ks[6], (D_HID,), jnp.float32),
        beta_t=s * jax.random.normal(ks[7], (D_HID,), jnp.float32),
        w1=s * jax.random.normal(ks[8], (D_HID, D_HID), jnp.float32),
        b1=s * jax.random.normal(ks[9], (D_HID,), jnp.float32),
        w2=s * jax.random.normal(ks[10], (D_HID, 1), jnp.float32),
        b2=s * jax.random.normal(ks[11], (1,), jnp.float32),
        w_bil=s * jax.random.normal(ks[0], (D_HID, 2 * D_HID), jnp.float32),
    )


def pack_param_slab(p):
    slab = jnp.zeros((P_ROWS, P_COLS), jnp.float32)
    slab = slab.at[0:D_IN, 0:D_HID].set(p["w_pre"])
    slab = slab.at[4, 0:D_HID].set(p["b_pre"])
    slab = slab.at[4, D_HID:2 * D_HID].set(p["b_gnn"])
    slab = slab.at[4, 2 * D_HID:3 * D_HID].set(p["gamma_q"])
    slab = slab.at[4, 3 * D_HID:4 * D_HID].set(p["beta_q"])
    slab = slab.at[5, 0:D_HID].set(p["b1"])
    slab = slab.at[5, D_HID:2 * D_HID].set(p["w2"][:, 0])        # w2^T as a row
    slab = slab.at[5, 2 * D_HID:3 * D_HID].set(p["gamma_t"])
    slab = slab.at[5, 3 * D_HID:4 * D_HID].set(p["beta_t"])
    slab = slab.at[6, 0].set(p["b2"][0])
    slab = slab.at[8:8 + D_HID, 0:D_HID].set(p["w_gnn"])
    slab = slab.at[8:8 + D_HID, D_HID:2 * D_HID].set(p["w1"])
    slab = slab.at[8:8 + D_HID, 2 * D_HID:4 * D_HID].set(p["w_bil"])
    return slab


def pack_graph_slab(Aq, Xq, At, Xt):
    # Packed ONCE per search episode (amortized), not per forward call.
    slab = jnp.zeros((N_TOT, G_COLS), jnp.float32)
    slab = slab.at[0:NQ, 0:NQ].set(Aq)                       # block-diagonal adj
    slab = slab.at[NQ:N_TOT, NQ:N_TOT].set(At)
    slab = slab.at[0:NQ, X_COL:X_COL + D_IN].set(Xq)         # stacked features
    slab = slab.at[NQ:N_TOT, X_COL:X_COL + D_IN].set(Xt)
    return slab


def make_norm_adj(key, n):
    # random symmetric adjacency + self loops, row-normalized by degree + 1e-8
    # (mirrors DVN.create_norm_vec's degree-based normalization vector)
    a = (jax.random.uniform(key, (n, n)) < 0.3).astype(jnp.float32)
    a = jnp.maximum(a, a.T)
    a = a + jnp.eye(n, dtype=jnp.float32)
    deg = jnp.sum(a, axis=1, keepdims=True)
    return a / (deg + 1e-8)


# ------------------------------ pure-JAX reference -------------------------------
def dvn_reference(Aq, Xq, At, Xt, p, u_arr, v_arr):
    def encode(a, x, gamma, beta):
        h0 = jnp.maximum(x @ p["w_pre"] + p["b_pre"], 0.0)
        h = jnp.maximum((a @ h0) @ p["w_gnn"] + p["b_gnn"], 0.0)
        mu = h.mean(-1, keepdims=True)
        var = ((h - mu) ** 2).mean(-1, keepdims=True)
        return (h - mu) / jnp.sqrt(var + 1e-5) * gamma + beta

    hq = encode(Aq, Xq, p["gamma_q"], p["beta_q"])
    ht = encode(At, Xt, p["gamma_t"], p["beta_t"])
    g_emb = hq.mean(0, keepdims=True)
    z = jnp.maximum(g_emb @ p["w1"] + p["b1"], 0.0)
    out_value = z @ p["w2"] + p["b2"]
    pol, val = [], []
    for i in range(u_arr.shape[0]):
        xu = hq[u_arr[i]][None, :]
        xu_cat = jnp.concatenate([xu, g_emb], axis=-1)
        hv = ht[v_arr[i]]
        scores = jnp.sum((hv @ p["w_bil"]) * xu_cat, axis=-1, keepdims=True)
        pol.append(scores)
        val.append(out_value)
    return jnp.stack(pol), jnp.stack(val)


if __name__ == "__main__":
    key = jax.random.PRNGKey(0)
    k_xq, k_xt, k_aq, k_at, k_u, k_v, k_p = jax.random.split(key, 7)

    Xq = jax.random.normal(k_xq, (NQ, D_IN), jnp.float32)
    Xt = jax.random.normal(k_xt, (NT, D_IN), jnp.float32)
    Aq = make_norm_adj(k_aq, NQ)
    At = make_norm_adj(k_at, NT)
    u_arr = jax.random.randint(k_u, (B,), 0, NQ, jnp.int32)
    v_arr = jax.random.randint(k_v, (B, K), 0, NT, jnp.int32)

    params = init_params(k_p)
    param_slab = pack_param_slab(params)
    graph_slab = pack_graph_slab(Aq, Xq, At, Xt)   # amortized per-episode packing

    out_policy, out_value = dvn_forward_jit(graph_slab, param_slab, u_arr, v_arr)
    jax.block_until_ready((out_policy, out_value))
    assert out_policy.shape == (B, K, 1) and out_value.shape == (B, 1, 1)

    ref_policy, ref_value = dvn_reference(Aq, Xq, At, Xt, params, u_arr, v_arr)
    assert float(jnp.max(jnp.abs(out_policy - ref_policy))) < 1e-3
    assert float(jnp.max(jnp.abs(out_value - ref_value))) < 1e-3

    print("KERNEL_OK")
</pallas_src>

<mosaic_0001>
module attributes {stable_mosaic.version = 11 : i64} {
  func.func @dvn_kernel(%arg0: i32, %arg1: memref<8xi32, #tpu.memory_space<smem>>, %arg2: memref<8x8xi32, #tpu.memory_space<smem>>, %arg3: memref<24x128xf32, #tpu.memory_space<vmem>>, %arg4: memref<40x128xf32, #tpu.memory_space<vmem>>, %arg5: memref<8x128xf32, #tpu.memory_space<vmem>>) attributes {dimension_semantics = [#tpu.dimension_semantics<parallel>], iteration_bounds = array<i64: 8>, scalar_prefetch = 2 : i64, scratch_operands = 0 : i64, tpu.core_type = #tpu.core_type<tc>, window_params = [{pipeline_mode = #tpu.pipeline_mode<synchronous>, transform_indices = @transform_0, window_bounds = array<i64: 24, 128>}, {pipeline_mode = #tpu.pipeline_mode<synchronous>, transform_indices = @transform_1, window_bounds = array<i64: 40, 128>}, {transform_indices = @transform_2, window_bounds = array<i64: 8, 128>}]} {
    %c0 = arith.constant 0 : index
    %c0_0 = arith.constant 0 : index
    %0 = vector.load %arg4[%c0, %c0_0] : memref<40x128xf32, #tpu.memory_space<vmem>>, vector<4x32xf32>
    %c4 = arith.constant 4 : index
    %c0_1 = arith.constant 0 : index
    %1 = vector.load %arg4[%c4, %c0_1] : memref<40x128xf32, #tpu.memory_space<vmem>>, vector<1x32xf32>
    %c4_2 = arith.constant 4 : index
    %c32 = arith.constant 32 : index
    %2 = vector.load %arg4[%c4_2, %c32] : memref<40x128xf32, #tpu.memory_space<vmem>>, vector<1x32xf32>
    %c4_3 = arith.constant 4 : index
    %c64 = arith.constant 64 : index
    %3 = vector.load %arg4[%c4_3, %c64] : memref<40x128xf32, #tpu.memory_space<vmem>>, vector<1x32xf32>
    %c4_4 = arith.constant 4 : index
    %c96 = arith.constant 96 : index
    %4 = vector.load %arg4[%c4_4, %c96] : memref<40x128xf32, #tpu.memory_space<vmem>>, vector<1x32xf32>
    %c5 = arith.constant 5 : index
    %c0_5 = arith.constant 0 : index
    %5 = vector.load %arg4[%c5, %c0_5] : memref<40x128xf32, #tpu.memory_space<vmem>>, vector<1x32xf32>
    %c5_6 = arith.constant 5 : index
    %c32_7 = arith.constant 32 : index
    %6 = vector.load %arg4[%c5_6, %c32_7] : memref<40x128xf32, #tpu.memory_space<vmem>>, vector<1x32xf32>
    %c5_8 = arith.constant 5 : index
    %c64_9 = arith.constant 64 : index
    %7 = vector.load %arg4[%c5_8, %c64_9] : memref<40x128xf32, #tpu.memory_space<vmem>>, vector<1x32xf32>
    %c5_10 = arith.constant 5 : index
    %c96_11 = arith.constant 96 : index
    %8 = vector.load %arg4[%c5_10, %c96_11] : memref<40x128xf32, #tpu.memory_space<vmem>>, vector<1x32xf32>
    %c6 = arith.constant 6 : index
    %c0_12 = arith.constant 0 : index
    %9 = vector.load %arg4[%c6, %c0_12] : memref<40x128xf32, #tpu.memory_space<vmem>>, vector<1x1xf32>
    %c8 = arith.constant 8 : index
    %c0_13 = arith.constant 0 : index
    %10 = vector.load %arg4[%c8, %c0_13] : memref<40x128xf32, #tpu.memory_space<vmem>>, vector<32x32xf32>
    %c8_14 = arith.constant 8 : index
    %c32_15 = arith.constant 32 : index
    %11 = vector.load %arg4[%c8_14, %c32_15] : memref<40x128xf32, #tpu.memory_space<vmem>>, vector<32x32xf32>
    %c8_16 = arith.constant 8 : index
    %c64_17 = arith.constant 64 : index
    %12 = vector.load %arg4[%c8_16, %c64_17] : memref<40x128xf32, #tpu.memory_space<vmem>>, vector<32x64xf32>
    %c0_18 = arith.constant 0 : index
    %c0_19 = arith.constant 0 : index
    %13 = vector.load %arg3[%c0_18, %c0_19] : memref<24x128xf32, #tpu.memory_space<vmem>>, vector<24x24xf32>
    %c0_20 = arith.constant 0 : index
    %c32_21 = arith.constant 32 : index
    %14 = vector.load %arg3[%c0_20, %c32_21] : memref<24x128xf32, #tpu.memory_space<vmem>>, vector<24x4xf32>
    %cst = arith.constant dense<0.000000e+00> : vector<24x32xf32>
    %15 = tpu.matmul %14, %0, %cst {dimension_numbers = #tpu.dot_dimension_numbers<[1], [0], [0], [1], [0, 0, 1, 1], [], []>} : vector<24x4xf32>, vector<4x32xf32>, vector<24x32xf32> -> vector<24x32xf32>
    %16 = vector.broadcast %1 : vector<1x32xf32> to vector<24x32xf32>
    %17 = arith.addf %15, %16 : vector<24x32xf32>
    %cst_22 = arith.constant 0.000000e+00 : f32
    %18 = vector.broadcast %cst_22 : f32 to vector<24x32xf32>
    %19 = arith.maximumf %17, %18 : vector<24x32xf32>
    %cst_23 = arith.constant dense<0.000000e+00> : vector<24x32xf32>
    %20 = tpu.matmul %13, %19, %cst_23 {dimension_numbers = #tpu.dot_dimension_numbers<[1], [0], [0], [1], [0, 0, 1, 1], [], []>} : vector<24x24xf32>, vector<24x32xf32>, vector<24x32xf32> -> vector<24x32xf32>
    %cst_24 = arith.constant dense<0.000000e+00> : vector<24x32xf32>
    %21 = tpu.matmul %20, %10, %cst_24 {dimension_numbers = #tpu.dot_dimension_numbers<[1], [0], [0], [1], [0, 0, 1, 1], [], []>} : vector<24x32xf32>, vector<32x32xf32>, vector<24x32xf32> -> vector<24x32xf32>
    %22 = vector.broadcast %2 : vector<1x32xf32> to vector<24x32xf32>
    %23 = arith.addf %21, %22 : vector<24x32xf32>
    %cst_25 = arith.constant 0.000000e+00 : f32
    %24 = vector.broadcast %cst_25 : f32 to vector<24x32xf32>
    %25 = arith.maximumf %23, %24 : vector<24x32xf32>
    %cst_26 = arith.constant dense<0.000000e+00> : vector<24xf32>
    %26 = vector.multi_reduction <add>, %25, %cst_26 [1] : vector<24x32xf32> to vector<24xf32>
    %27 = vector.shape_cast %26 : vector<24xf32> to vector<24x1xf32>
    %cst_27 = arith.constant 3.200000e+01 : f32
    %28 = vector.broadcast %cst_27 : f32 to vector<24x1xf32>
    %29 = arith.divf %27, %28 : vector<24x1xf32>
    %30 = vector.broadcast %29 : vector<24x1xf32> to vector<24x32xf32>
    %31 = arith.subf %25, %30 : vector<24x32xf32>
    %32 = arith.mulf %31, %31 : vector<24x32xf32>
    %cst_28 = arith.constant dense<0.000000e+00> : vector<24xf32>
    %33 = vector.multi_reduction <add>, %32, %cst_28 [1] : vector<24x32xf32> to vector<24xf32>
    %34 = vector.shape_cast %33 : vector<24xf32> to vector<24x1xf32>
    %cst_29 = arith.constant 3.200000e+01 : f32
    %35 = vector.broadcast %cst_29 : f32 to vector<24x1xf32>
    %36 = arith.divf %34, %35 : vector<24x1xf32>
    %37 = vector.broadcast %29 : vector<24x1xf32> to vector<24x32xf32>
    %38 = arith.subf %25, %37 : vector<24x32xf32>
    %cst_30 = arith.constant 9.99999974E-6 : f32
    %39 = vector.broadcast %cst_30 : f32 to vector<24x1xf32>
    %40 = arith.addf %36, %39 : vector<24x1xf32>
    %41 = math.rsqrt %40 : vector<24x1xf32>
    %42 = vector.broadcast %41 : vector<24x1xf32> to vector<24x32xf32>
    %43 = arith.mulf %38, %42 : vector<24x32xf32>
    %44 = tpu.iota {dimensions = array<i32: 0>} : vector<24x1xi32>
    %c8_i32 = arith.constant 8 : i32
    %45 = vector.broadcast %c8_i32 : i32 to vector<24x1xi32>
    %46 = arith.cmpi slt, %44, %45 : vector<24x1xi32>
    %47 = vector.shape_cast %46 : vector<24x1xi1> to vector<24x1xi1>
    %48 = vector.broadcast %47 : vector<24x1xi1> to vector<24x32xi1>
    %49 = vector.shape_cast %3 : vector<1x32xf32> to vector<1x32xf32>
    %50 = vector.broadcast %49 : vector<1x32xf32> to vector<24x32xf32>
    %51 = vector.shape_cast %7 : vector<1x32xf32> to vector<1x32xf32>
    %52 = vector.broadcast %51 : vector<1x32xf32> to vector<24x32xf32>
    %53 = arith.select %48, %50, %52 : vector<24x32xi1>, vector<24x32xf32>
    %54 = arith.mulf %43, %53 : vector<24x32xf32>
    %55 = vector.shape_cast %46 : vector<24x1xi1> to vector<24x1xi1>
    %56 = vector.broadcast %55 : vector<24x1xi1> to vector<24x32xi1>
    %57 = vector.shape_cast %4 : vector<1x32xf32> to vector<1x32xf32>
    %58 = vector.broadcast %57 : vector<1x32xf32> to vector<24x32xf32>
    %59 = vector.shape_cast %8 : vector<1x32xf32> to vector<1x32xf32>
    %60 = vector.broadcast %59 : vector<1x32xf32> to vector<24x32xf32>
    %61 = arith.select %56, %58, %60 : vector<24x32xi1>, vector<24x32xf32>
    %62 = arith.addf %54, %61 : vector<24x32xf32>
    %63 = tpu.iota {dimensions = array<i32: 0>} : vector<10x24xi32>
    %64 = tpu.iota {dimensions = array<i32: 1>} : vector<10x24xi32>
    %65 = tpu.iota {dimensions = array<i32: 0>} : vector<10x1xi32>
    %c0_i32 = arith.constant 0 : i32
    %66 = vector.broadcast %c0_i32 : i32 to vector<10x1xi32>
    %67 = arith.cmpi eq, %65, %66 : vector<10x1xi32>
    %68 = arith.index_cast %arg0 : i32 to index
    %69 = memref.load %arg1[%68] : memref<8xi32, #tpu.memory_space<smem>>
    %c-1_i32 = arith.constant -1 : i32
    %70 = vector.broadcast %c-1_i32 : i32 to vector<10x1xi32>
    %71 = vector.broadcast %69 : i32 to vector<10x1xi32>
    %72 = arith.select %67, %71, %70 : vector<10x1xi1>, vector<10x1xi32>
    %c2_i32 = arith.constant 2 : i32
    %73 = vector.broadcast %c2_i32 : i32 to vector<10x1xi32>
    %74 = arith.cmpi eq, %65, %73 : vector<10x1xi32>
    %75 = arith.index_cast %arg0 : i32 to index
    %c0_31 = arith.constant 0 : index
    %76 = memref.load %arg2[%75, %c0_31] : memref<8x8xi32, #tpu.memory_space<smem>>
    %c8_i32_32 = arith.constant 8 : i32
    %77 = arith.addi %76, %c8_i32_32 : i32
    %78 = vector.broadcast %77 : i32 to vector<10x1xi32>
    %79 = arith.select %74, %78, %72 : vector<10x1xi1>, vector<10x1xi32>
    %c3_i32 = arith.constant 3 : i32
    %80 = vector.broadcast %c3_i32 : i32 to vector<10x1xi32>
    %81 = arith.cmpi eq, %65, %80 : vector<10x1xi32>
    %82 = arith.index_cast %arg0 : i32 to index
    %c1 = arith.constant 1 : index
    %83 = memref.load %arg2[%82, %c1] : memref<8x8xi32, #tpu.memory_space<smem>>
    %c8_i32_33 = arith.constant 8 : i32
    %84 = arith.addi %83, %c8_i32_33 : i32
    %85 = vector.broadcast %84 : i32 to vector<10x1xi32>
    %86 = arith.select %81, %85, %79 : vector<10x1xi1>, vector<10x1xi32>
    %c4_i32 = arith.constant 4 : i32
    %87 = vector.broadcast %c4_i32 : i32 to vector<10x1xi32>
    %88 = arith.cmpi eq, %65, %87 : vector<10x1xi32>
    %89 = arith.index_cast %arg0 : i32 to index
    %c2 = arith.constant 2 : index
    %90 = memref.load %arg2[%89, %c2] : memref<8x8xi32, #tpu.memory_space<smem>>
    %c8_i32_34 = arith.constant 8 : i32
    %91 = arith.addi %90, %c8_i32_34 : i32
    %92 = vector.broadcast %91 : i32 to vector<10x1xi32>
    %93 = arith.select %88, %92, %86 : vector<10x1xi1>, vector<10x1xi32>
    %c5_i32 = arith.constant 5 : i32
    %94 = vector.broadcast %c5_i32 : i32 to vector<10x1xi32>
    %95 = arith.cmpi eq, %65, %94 : vector<10x1xi32>
    %96 = arith.index_cast %arg0 : i32 to index
    %c3 = arith.constant 3 : index
    %97 = memref.load %arg2[%96, %c3] : memref<8x8xi32, #tpu.memory_space<smem>>
    %c8_i32_35 = arith.constant 8 : i32
    %98 = arith.addi %97, %c8_i32_35 : i32
    %99 = vector.broadcast %98 : i32 to vector<10x1xi32>
    %100 = arith.select %95, %99, %93 : vector<10x1xi1>, vector<10x1xi32>
    %c6_i32 = arith.constant 6 : i32
    %101 = vector.broadcast %c6_i32 : i32 to vector<10x1xi32>
    %102 = arith.cmpi eq, %65, %101 : vector<10x1xi32>
    %103 = arith.index_cast %arg0 : i32 to index
    %c4_36 = arith.constant 4 : index
    %104 = memref.load %arg2[%103, %c4_36] : memref<8x8xi32, #tpu.memory_space<smem>>
    %c8_i32_37 = arith.constant 8 : i32
    %105 = arith.addi %104, %c8_i32_37 : i32
    %106 = vector.broadcast %105 : i32 to vector<10x1xi32>
    %107 = arith.select %102, %106, %100 : vector<10x1xi1>, vector<10x1xi32>
    %c7_i32 = arith.constant 7 : i32
    %108 = vector.broadcast %c7_i32 : i32 to vector<10x1xi32>
    %109 = arith.cmpi eq, %65, %108 : vector<10x1xi32>
    %110 = arith.index_cast %arg0 : i32 to index
    %c5_38 = arith.constant 5 : index
    %111 = memref.load %arg2[%110, %c5_38] : memref<8x8xi32, #tpu.memory_space<smem>>
    %c8_i32_39 = arith.constant 8 : i32
    %112 = arith.addi %111, %c8_i32_39 : i32
    %113 = vector.broadcast %112 : i32 to vector<10x1xi32>
    %114 = arith.select %109, %113, %107 : vector<10x1xi1>, vector<10x1xi32>
    %c8_i32_40 = arith.constant 8 : i32
    %115 = vector.broadcast %c8_i32_40 : i32 to vector<10x1xi32>
    %116 = arith.cmpi eq, %65, %115 : vector<10x1xi32>
    %117 = arith.index_cast %arg0 : i32 to index
    %c6_41 = arith.constant 6 : index
    %118 = memref.load %arg2[%117, %c6_41] : memref<8x8xi32, #tpu.memory_space<smem>>
    %c8_i32_42 = arith.constant 8 : i32
    %119 = arith.addi %118, %c8_i32_42 : i32
    %120 = vector.broadcast %119 : i32 to vector<10x1xi32>
    %121 = arith.select %116, %120, %114 : vector<10x1xi1>, vector<10x1xi32>
    %c9_i32 = arith.constant 9 : i32
    %122 = vector.broadcast %c9_i32 : i32 to vector<10x1xi32>
    %123 = arith.cmpi eq, %65, %122 : vector<10x1xi32>
    %124 = arith.index_cast %arg0 : i32 to index
    %c7 = arith.constant 7 : index
    %125 = memref.load %arg2[%124, %c7] : memref<8x8xi32, #tpu.memory_space<smem>>
    %c8_i32_43 = arith.constant 8 : i32
    %126 = arith.addi %125, %c8_i32_43 : i32
    %127 = vector.broadcast %126 : i32 to vector<10x1xi32>
    %128 = arith.select %123, %127, %121 : vector<10x1xi1>, vector<10x1xi32>
    %129 = vector.broadcast %128 : vector<10x1xi32> to vector<10x24xi32>
    %130 = arith.cmpi eq, %64, %129 : vector<10x24xi32>
    %cst_44 = arith.constant 1.000000e+00 : f32
    %cst_45 = arith.constant 0.000000e+00 : f32
    %131 = vector.broadcast %cst_44 : f32 to vector<10x24xf32>
    %132 = vector.broadcast %cst_45 : f32 to vector<10x24xf32>
    %133 = arith.select %130, %131, %132 : vector<10x24xi1>, vector<10x24xf32>
    %c1_i32 = arith.constant 1 : i32
    %134 = vector.broadcast %c1_i32 : i32 to vector<10x24xi32>
    %135 = arith.cmpi eq, %63, %134 : vector<10x24xi32>
    %c8_i32_46 = arith.constant 8 : i32
    %136 = vector.broadcast %c8_i32_46 : i32 to vector<10x24xi32>
    %137 = arith.cmpi slt, %64, %136 : vector<10x24xi32>
    %138 = arith.andi %135, %137 : vector<10x24xi1>
    %cst_47 = arith.constant 1.250000e-01 : f32
    %cst_48 = arith.constant 0.000000e+00 : f32
    %139 = vector.broadcast %cst_47 : f32 to vector<10x24xf32>
    %140 = vector.broadcast %cst_48 : f32 to vector<10x24xf32>
    %141 = arith.select %138, %139, %140 : vector<10x24xi1>, vector<10x24xf32>
    %142 = arith.addf %133, %141 : vector<10x24xf32>
    %cst_49 = arith.constant dense<0.000000e+00> : vector<10x32xf32>
    %143 = tpu.matmul %142, %62, %cst_49 {dimension_numbers = #tpu.dot_dimension_numbers<[1], [0], [0], [1], [0, 0, 1, 1], [], []>} : vector<10x24xf32>, vector<24x32xf32>, vector<10x32xf32> -> vector<10x32xf32>
    %144 = vector.extract_strided_slice %143 {offsets = [0, 0], sizes = [1, 32], strides = [1, 1]} : vector<10x32xf32> to vector<1x32xf32>
    %145 = vector.extract_strided_slice %143 {offsets = [1, 0], sizes = [1, 32], strides = [1, 1]} : vector<10x32xf32> to vector<1x32xf32>
    %146 = vector.extract_strided_slice %143 {offsets = [2, 0], sizes = [8, 32], strides = [1, 1]} : vector<10x32xf32> to vector<8x32xf32>
    %cst_50 = arith.constant dense<0.000000e+00> : vector<1x32xf32>
    %147 = tpu.matmul %145, %11, %cst_50 {dimension_numbers = #tpu.dot_dimension_numbers<[1], [0], [0], [1], [0, 0, 1, 1], [], []>} : vector<1x32xf32>, vector<32x32xf32>, vector<1x32xf32> -> vector<1x32xf32>
    %148 = arith.addf %147, %5 : vector<1x32xf32>
    %cst_51 = arith.constant 0.000000e+00 : f32
    %149 = vector.broadcast %cst_51 : f32 to vector<1x32xf32>
    %150 = arith.maximumf %148, %149 : vector<1x32xf32>
    %151 = arith.mulf %150, %6 : vector<1x32xf32>
    %cst_52 = arith.constant dense<0.000000e+00> : vector<1xf32>
    %152 = vector.multi_reduction <add>, %151, %cst_52 [1] : vector<1x32xf32> to vector<1xf32>
    %153 = vector.shape_cast %152 : vector<1xf32> to vector<1x1xf32>
    %154 = arith.addf %153, %9 : vector<1x1xf32>
    %cst_53 = arith.constant dense<0.000000e+00> : vector<8x64xf32>
    %155 = tpu.matmul %146, %12, %cst_53 {dimension_numbers = #tpu.dot_dimension_numbers<[1], [0], [0], [1], [0, 0, 1, 1], [], []>} : vector<8x32xf32>, vector<32x64xf32>, vector<8x64xf32> -> vector<8x64xf32>
    %156 = vector.extract_strided_slice %155 {offsets = [0, 0], sizes = [8, 32], strides = [1, 1]} : vector<8x64xf32> to vector<8x32xf32>
    %157 = vector.broadcast %144 : vector<1x32xf32> to vector<8x32xf32>
    %158 = arith.mulf %156, %157 : vector<8x32xf32>
    %cst_54 = arith.constant dense<0.000000e+00> : vector<8xf32>
    %159 = vector.multi_reduction <add>, %158, %cst_54 [1] : vector<8x32xf32> to vector<8xf32>
    %160 = vector.shape_cast %159 : vector<8xf32> to vector<8x1xf32>
    %161 = vector.extract_strided_slice %155 {offsets = [0, 32], sizes = [8, 32], strides = [1, 1]} : vector<8x64xf32> to vector<8x32xf32>
    %162 = vector.broadcast %145 : vector<1x32xf32> to vector<8x32xf32>
    %163 = arith.mulf %161, %162 : vector<8x32xf32>
    %cst_55 = arith.constant dense<0.000000e+00> : vector<8xf32>
    %164 = vector.multi_reduction <add>, %163, %cst_55 [1] : vector<8x32xf32> to vector<8xf32>
    %165 = vector.shape_cast %164 : vector<8xf32> to vector<8x1xf32>
    %166 = arith.addf %160, %165 : vector<8x1xf32>
    %167 = tpu.iota {dimensions = array<i32: 0>} : vector<8x128xi32>
    %168 = tpu.iota {dimensions = array<i32: 1>} : vector<8x128xi32>
    %c0_i32_56 = arith.constant 0 : i32
    %169 = vector.broadcast %c0_i32_56 : i32 to vector<8x128xi32>
    %170 = arith.cmpi eq, %168, %169 : vector<8x128xi32>
    %cst_57 = arith.constant 0.000000e+00 : f32
    %171 = vector.shape_cast %166 : vector<8x1xf32> to vector<8x1xf32>
    %172 = vector.broadcast %171 : vector<8x1xf32> to vector<8x128xf32>
    %173 = vector.broadcast %cst_57 : f32 to vector<8x128xf32>
    %174 = arith.select %170, %172, %173 : vector<8x128xi1>, vector<8x128xf32>
    %c0_i32_58 = arith.constant 0 : i32
    %175 = vector.broadcast %c0_i32_58 : i32 to vector<8x128xi32>
    %176 = arith.cmpi eq, %167, %175 : vector<8x128xi32>
    %c1_i32_59 = arith.constant 1 : i32
    %177 = vector.broadcast %c1_i32_59 : i32 to vector<8x128xi32>
    %178 = arith.cmpi eq, %168, %177 : vector<8x128xi32>
    %179 = arith.andi %176, %178 : vector<8x128xi1>
    %cst_60 = arith.constant 0.000000e+00 : f32
    %180 = vector.shape_cast %154 : vector<1x1xf32> to vector<1x1xf32>
    %181 = vector.broadcast %180 : vector<1x1xf32> to vector<8x128xf32>
    %182 = vector.broadcast %cst_60 : f32 to vector<8x128xf32>
    %183 = arith.select %179, %181, %182 : vector<8x128xi1>, vector<8x128xf32>
    %184 = arith.addf %174, %183 : vector<8x128xf32>
    %c0_61 = arith.constant 0 : index
    %c0_62 = arith.constant 0 : index
    %185 = vector.load %arg5[%c0_61, %c0_62] : memref<8x128xf32, #tpu.memory_space<vmem>>, vector<8x128xf32>
    tpu.vector_store %arg5[%c0_61, %c0_62], %184 {strides = array<i32>} : memref<8x128xf32, #tpu.memory_space<vmem>>, vector<8x128xf32>,
    return
  }
  func.func @transform_0(%arg0: i32, %arg1: memref<8xi32, #tpu.memory_space<smem>>, %arg2: memref<8x8xi32, #tpu.memory_space<smem>>) -> (i32, i32) {
    %c0_i32 = arith.constant 0 : i32
    %c0_i32_0 = arith.constant 0 : i32
    %c0_i32_1 = arith.constant 0 : i32
    return %c0_i32, %c0_i32_0 : i32, i32
  }
  func.func @transform_1(%arg0: i32, %arg1: memref<8xi32, #tpu.memory_space<smem>>, %arg2: memref<8x8xi32, #tpu.memory_space<smem>>) -> (i32, i32) {
    %c0_i32 = arith.constant 0 : i32
    %c0_i32_0 = arith.constant 0 : i32
    %c0_i32_1 = arith.constant 0 : i32
    return %c0_i32, %c0_i32_0 : i32, i32
  }
  func.func @transform_2(%arg0: i32, %arg1: memref<8xi32, #tpu.memory_space<smem>>, %arg2: memref<8x8xi32, #tpu.memory_space<smem>>) -> (i32, i32) {
    %c0_i32 = arith.constant 0 : i32
    %c0_i32_0 = arith.constant 0 : i32
    return %arg0, %c0_i32 : i32, i32
  }
}

</mosaic_0001>

<llo_original>
// kernel: dvn_forward.1
$region0: #{dvn_forward.1}
  #allocation0 [shape = 'u32[]', space=smem, size = 0x4, offset = 0x4, fixed_abs, tag = 'smem constant byte address 0x4 - core index']
  #allocation1 [shape = 'u32[72,128]{1,0:T(1,128)}', space=vmem, size = 0x9000, scoped, tag = 'internal scratch']
  #allocation2 [shape = 's32[1]{0}', space=sflag, size = 0x4, scoped, tag = 'scoped memory for dvn_forward.1']
  #allocation3 [shape = 'u8[512]{0}', space=smem, size = 0x200, scoped, tag = 'prefetched SMEM operand 0']
  #allocation4 [shape = 'u8[4096]{0}', space=smem, size = 0x1000, scoped, tag = 'prefetched SMEM operand 1']
  %s0 = inlined_call_operand.hbm [shape: s32[8], index: 0, kind: input, shape index: {}]
  %s1 = inlined_call_operand.hbm [shape: s32[8,8], index: 1, kind: input, shape index: {}]
  %s2 = inlined_call_operand.hbm [shape: f32[24,128], index: 2, kind: input, shape index: {}]
  %s3 = inlined_call_operand.hbm [shape: f32[40,128], index: 3, kind: input, shape index: {}]
  %s4 = inlined_call_operand.vmem [shape: f32[64,128], index: 4, kind: output, shape index: {}]
  %s5 = sld [smem:[#allocation0]]
  $region49: #{dvn_forward.1} parent=0
    _
  %s7 = ssub.s32 1, %s5
  %s8 = scalar_select 0, %s7, %s5
  %s10 = sshll.u32 %s0, 4
  %s11 = int_to_ptr.hbm [resolvable:$true] %s10
  %13 = dma.hbm_to_smem %s11, 16, [#allocation3], [#allocation2]
  %s15 = sshll.u32 %s1, 4
  %s16 = int_to_ptr.hbm [resolvable:$true] %s15
  %18 = dma.hbm_to_smem %s16, 128, [#allocation4], [#allocation2]
  %20 = dma.done [#allocation2], 144
  %21 = sfence
  $region1: #{dvn_forward.1} parent=0
    #allocation5 [shape = 'u8[12288]{0}', space=vmem, size = 0x3000, scoped, tag = 'input window, operand 2, single buffered']
    #allocation6 [shape = 's32[2]{0}', space=sflag, size = 0x8, scoped, tag = 'scoped memory for dvn_forward.1']
    #allocation7 [shape = 'u8[20480]{0}', space=vmem, size = 0x5000, scoped, tag = 'input window, operand 3, single buffered']
    #allocation8 [shape = 's32[1]{0}', space=sflag, size = 0x4, scoped, tag = 'scoped memory for dvn_forward.1']
    %22 = vsyncpa [#allocation6], 0
    %23 = vsyncpa [#allocation8], 0
    loop: start=0, step=1, limit=10
    $region2: #{dvn_forward.1} parent=1 // loop_pre_header
      _
    $region3: #{dvn_forward.1} parent=1 // loop_header
      %s25 = sphi 0, %s29
      %p26 = scmp.ge.s32.totalorder %s25, 10
      %s33 = sphi 0, %s33
      %s35 = sphi 0, %s33
      %s36 = sphi 0, %s35
      %s50 = sphi 0, %s36
      %s54 = sphi 0, %s54
      %s56 = sphi 0, %s54
      %s57 = sphi 0, %s56
      %s71 = sphi 0, %s57
      %s77 = sphi 0, %s79
      %s80 = sphi 0, %s77
      %s81 = sphi 0, %s80
      %s97 = sphi 0, %s81
    $region4: #{dvn_forward.1} parent=1 // loop_header_branch
      %28 = sbr.rel (%p26) target = $region8
    $region5: #{dvn_forward.1} parent=1 // loop_body
      %s30 = ssub.s32 %s25, 1
      %s31 = ssub.s32 %s25, 2
      %s32 = sadd.s32 %s25, 1
      %s34 = sadd.s32 %s33, 1
      %p37 = scmp.eq.s32.totalorder %s25, 7
      %p38 = scmp.ne.s32.totalorder %s33, %s35
      %p39 = scmp.eq.s32.totalorder %s25, 0
      %p40 = por %p38, %p39
      %p41 = scmp.ne.s32.totalorder %s33, %s35
      %p42 = scmp.eq.s32.totalorder %s30, 7
      %p43 = por %p41, %p42
      %p44 = scmp.ne.s32.totalorder %s35, %s36
      %p45 = scmp.eq.s32.totalorder %s30, 0
      %p46 = por %p44, %p45
      %p47 = scmp.ne.s32.totalorder %s35, %s36
      %p48 = scmp.eq.s32.totalorder %s31, 7
      %p49 = por %p47, %p48
      %p51 = scmp.ne.s32.totalorder %s36, %s50
      %p52 = scmp.eq.s32.totalorder %s31, 0
      %p53 = por %p51, %p52
      %s55 = sadd.s32 %s54, 1
      %p58 = scmp.eq.s32.totalorder %s25, 7
      %p59 = scmp.ne.s32.totalorder %s54, %s56
      %p60 = scmp.eq.s32.totalorder %s25, 0
      %p61 = por %p59, %p60
      %p62 = scmp.ne.s32.totalorder %s54, %s56
      %p63 = scmp.eq.s32.totalorder %s30, 7
      %p64 = por %p62, %p63
      %p65 = scmp.ne.s32.totalorder %s56, %s57
      %p66 = scmp.eq.s32.totalorder %s30, 0
      %p67 = por %p65, %p66
      %p68 = scmp.ne.s32.totalorder %s56, %s57
      %p69 = scmp.eq.s32.totalorder %s31, 7
      %p70 = por %p68, %p69
      %p72 = scmp.ne.s32.totalorder %s57, %s71
      %p73 = scmp.eq.s32.totalorder %s31, 0
      %p74 = por %p72, %p73
      %s75 = ssub.s32 %s25, %s32
      %p76 = scmp.eq.s32.totalorder %s75, 0
      %s78 = sadd.s32 %s77, 1
      %s79 = scalar_select %p76, %s77, %s78
      %p82 = pneg %p76
      %p83 = scmp.eq.s32.totalorder %s25, 7
      %p84 = por %p82, %p83
      %p85 = scmp.ne.s32.totalorder %s77, %s80
      %p86 = scmp.eq.s32.totalorder %s25, 0
      %p87 = por %p85, %p86
      %p88 = scmp.ne.s32.totalorder %s77, %s80
      %p89 = scmp.eq.s32.totalorder %s30, 7
      %p90 = por %p88, %p89
      %p91 = scmp.ne.s32.totalorder %s80, %s81
      %p92 = scmp.eq.s32.totalorder %s30, 0
      %p93 = por %p91, %p92
      %p94 = scmp.ne.s32.totalorder %s80, %s81
      %p95 = scmp.eq.s32.totalorder %s31, 7
      %p96 = por %p94, %p95
      %p98 = scmp.ne.s32.totalorder %s81, %s97
      %p99 = scmp.eq.s32.totalorder %s31, 0
      %p100 = por %p98, %p99
      %p101 = scmp.le.s32.totalorder 1, %s25
      %p102 = scmp.lt.s32.totalorder %s25, 9
      %p103 = pnand %p101, %p102
      %p104 = pneg %p103
      // Predicated region
      $region9: #{dvn_forward.1} parent=5 // pred_check
        _
      $region10: #{dvn_forward.1} parent=5 // pred_check_branch
        %106 = sbr.rel (%p103) target = $region12
      $region11: #{dvn_forward.1} parent=5 // pred_region
        %s107 = ssub.s32 %s25, 1
        // Predicated region
        $region13: #{dvn_forward.1} parent=11 // pred_check
          %p108 = pneg %p46
        $region14: #{dvn_forward.1} parent=11 // pred_check_branch
          %110 = sbr.rel (%p108) target = $region16
        $region15: #{dvn_forward.1} parent=11 // pred_region
          %112 = vsyncadd [#allocation6], 0
          %s113 = sshll.u32 %s2, 4
          %s114 = int_to_ptr.hbm [resolvable:$true] %s113
          %s115 = sshll.u32 [#allocation5], 4
          %s116 = int_to_ptr.vmem [resolvable:$true] %s115
          %121 = dma.hbm_to_vmem [thread:$0]  %s114, 384, %s116, [#allocation6], 128, 128, 8
        $region16: #{dvn_forward.1} parent=11 // pred_fallthru
          _
        // Predicated region
        $region17: #{dvn_forward.1} parent=11 // pred_check
          %p122 = pneg %p67
        $region18: #{dvn_forward.1} parent=11 // pred_check_branch
          %124 = sbr.rel (%p122) target = $region20
        $region19: #{dvn_forward.1} parent=11 // pred_region
          %126 = vsyncadd [#allocation8], 0
          %s127 = sshll.u32 %s3, 4
          %s128 = int_to_ptr.hbm [resolvable:$true] %s127
          %s129 = sshll.u32 [#allocation7], 4
          %s130 = int_to_ptr.vmem [resolvable:$true] %s129
          %135 = dma.hbm_to_vmem [thread:$0]  %s128, 640, %s130, [#allocation8], 128, 128, 8
        $region20: #{dvn_forward.1} parent=11 // pred_fallthru
          _
      $region12: #{dvn_forward.1} parent=5 // pred_fallthru
        _
      %p136 = scmp.lt.s32.totalorder %s25, 8
      // Predicated region
      $region21: #{dvn_forward.1} parent=5 // pred_check
        %p137 = pneg %p136
      $region22: #{dvn_forward.1} parent=5 // pred_check_branch
        %139 = sbr.rel (%p137) target = $region24
      $region23: #{dvn_forward.1} parent=5 // pred_region
        _
      $region24: #{dvn_forward.1} parent=5 // pred_fallthru
        _
      %p140 = scmp.le.s32.totalorder 1, %s25
      %p141 = scmp.lt.s32.totalorder %s25, 9
      %p142 = pnand %p140, %p141
      %p143 = pneg %p142
      // Predicated region
      $region25: #{dvn_forward.1} parent=5 // pred_check
        _
      $region26: #{dvn_forward.1} parent=5 // pred_check_branch
        %145 = sbr.rel (%p142) target = $region28
      $region27: #{dvn_forward.1} parent=5 // pred_region
        %s146 = ssub.s32 %s25, 1
        // Predicated region
        $region29: #{dvn_forward.1} parent=27 // pred_check
          %p147 = pneg %p46
        $region30: #{dvn_forward.1} parent=27 // pred_check_branch
          %149 = sbr.rel (%p147) target = $region32
        $region31: #{dvn_forward.1} parent=27 // pred_region
          %151 = dma.done [#allocation6], 384
        $region32: #{dvn_forward.1} parent=27 // pred_fallthru
          _
        // Predicated region
        $region33: #{dvn_forward.1} parent=27 // pred_check
          %p152 = pneg %p67
        $region34: #{dvn_forward.1} parent=27 // pred_check_branch
          %154 = sbr.rel (%p152) target = $region36
        $region35: #{dvn_forward.1} parent=27 // pred_region
          %156 = dma.done [#allocation8], 640
        $region36: #{dvn_forward.1} parent=27 // pred_fallthru
          _
        %p157 = pneg %p46
        %p158 = pneg %p43
        %p159 = pneg %p67
        %p160 = pneg %p64
        %p161 = pneg %p93
        %p162 = pneg %p90
        %p163 = scmp.lt.s32.totalorder %s30, 7
        %s164 = scalar_select %p163, %s30, 7
        %s165 = smul.addr %s164, 8
        %s166 = scalar_lea.vmem %s4, %s165
        %p167 = scmp.lt.s32.totalorder %s30, 7
        %s168 = scalar_select %p167, %s30, 7
        %s169 = smul.addr %s168, 8
        %s170 = scalar_lea.vmem %s4, %s169
        %v171 = vld [vmem:[#allocation7] sm:$0xf]
        %v172 = vld [vmem:[#allocation7 + $0x4] sm:$0x1]
        %v173 = vld [vmem:[#allocation7 + $0x5] sm:$0x1]
        %v174 = vld [vmem:[#allocation7 + $0x6] sm:$0x1]
        %v175 = vld [vmem:[#allocation7 + $0x8] sm:$0xff]
        %v176 = vld [vmem:[#allocation7 + $0x10] sm:$0xff]
        %v177 = vld [vmem:[#allocation7 + $0x18] sm:$0xff]
        %v178 = vld [vmem:[#allocation7 + $0x20] sm:$0xff]
        %v179 = vld [vmem:[#allocation5] sm:$0xff]
        %v180 = vld [vmem:[#allocation5 + $0x8] sm:$0xff]
        %v181 = vld [vmem:[#allocation5 + $0x10] sm:$0xff]
        %v182 = vperm.slane %v172, 0
        %186 = vrot.lane.b32.xlu0 %v179, 96
        %v187 = vpop.permute.xlu0 %186
        %188 = vrot.lane.b32.xlu0 %v180, 96
        %v189 = vpop.permute.xlu0 %188
        %190 = vrot.lane.b32.xlu0 %v181, 96
        %v191 = vpop.permute.xlu0 %190
        %vm192 = vcmask 31744
        %v193 = vsel %vm192, %v187, 0
        %v195 = vsel %vm192, %v189, 0
        %v197 = vsel %vm192, %v191, 0
        %vm199 = vcmask 1043456
        %v201 = vsel %vm199, %v171, 0
        %203 = vmatpush.msra.mxu0 0.0
        %204 = vmatpush.msra.mxu0 0.0
        %205 = vmatpush.msra.mxu0 0.0
        %206 = vmatpush.msra.mxu0 0.0
        %207 = vmatpush.msra.mxu0 0.0
        %208 = vmatpush.msra.mxu0 0.0
        %209 = vmatpush.msra.mxu0 0.0
        %210 = vmatpush.msra.mxu0 0.0
        %211 = vmatpush.msra.mxu0 0.0
        %212 = vmatpush.msra.mxu0 0.0
        %213 = vmatpush.msra.mxu0 0.0
        %214 = vmatpush.msra.mxu0 0.0
        %215 = vmatpush.msra.mxu0 0.0
        %216 = vmatpush.msra.mxu0 0.0
        %217 = vmatpush.msra.mxu0 0.0
        %218 = vmatpush.msra.mxu0 %v201
        %219 = vmatmul.f32.gmra.mxu0 %v193
        %v220 = vpop.f32.mrf.mxu0
        %v221 = vadd.f32 %v182, %v220
        %222 = vmatmul.f32.gmra.mxu0 %v195
        %v223 = vpop.f32.mrf.mxu0
        %v224 = vadd.f32 %v182, %v223
        %225 = vmatmul.f32.gmra.mxu0 %v197
        %v226 = vpop.f32.mrf.mxu0
        %v227 = vadd.f32 %v182, %v226
        %228 = vdwg.mxu0
        %v229 = vmax.f32 %v221, 0.0
        %v230 = vmax.f32 %v224, 0.0
        %v231 = vmax.f32 %v227, 0.0
        %vm232 = vcmask 195584
        %v233 = vsel %vm232, %v179, 0
        %v235 = vsel %vm232, %v180, 0
        %v237 = vsel %vm232, %v181, 0
        %239 = vmatpush.msra.mxu0 0.0
        %240 = vmatpush.msra.mxu0 0.0
        %241 = vmatpush.msra.mxu0 0.0
        %242 = vmatpush.msra.mxu0 0.0
        %243 = vmatpush.msra.mxu0 0.0
        %244 = vmatpush.msra.mxu0 0.0
        %245 = vmatpush.msra.mxu0 0.0
        %246 = vmatpush.msra.mxu0 0.0
        %247 = vmatpush.msra.mxu0 0.0
        %248 = vmatpush.msra.mxu0 0.0
        %249 = vmatpush.msra.mxu0 0.0
        %250 = vmatpush.msra.mxu0 0.0
        %251 = vmatpush.msra.mxu0 0.0
        %252 = vmatpush.msra.mxu0 %v231
        %253 = vmatpush.msra.mxu0 %v230
        %254 = vmatpush.msra.mxu0 %v229
        %255 = vmatmul.f32.gmra.mxu0 %v233
        %v256 = vpop.f32.mrf.mxu0
        %v257 = vadd.f32 0.0, %v256
        %258 = vmatmul.f32.gmra.mxu0 %v235
        %v259 = vpop.f32.mrf.mxu0
        %v260 = vadd.f32 0.0, %v259
        %261 = vmatmul.f32.gmra.mxu0 %v237
        %v262 = vpop.f32.mrf.mxu0
        %v263 = vadd.f32 0.0, %v262
        %264 = vdwg.mxu0
        %266 = vrot.lane.b32.xlu0 %v182, 96
        %v267 = vpop.permute.xlu0 %266
        %vm269 = vcmask 261120
        %v271 = vsel %vm269, %v257, 0
        %v274 = vsel %vm269, %v260, 0
        %v277 = vsel %vm269, %v263, 0
        %279 = vmatpush.msra.mxu0 0.0
        %280 = vmatpush.msra.mxu0 0.0
        %281 = vmatpush.msra.mxu0 0.0
        %282 = vmatpush.msra.mxu0 0.0
        %283 = vmatpush.msra.mxu0 0.0
        %284 = vmatpush.msra.mxu0 0.0
        %285 = vmatpush.msra.mxu0 0.0
        %286 = vmatpush.msra.mxu0 0.0
        %287 = vmatpush.msra.mxu0 0.0
        %288 = vmatpush.msra.mxu0 0.0
        %289 = vmatpush.msra.mxu0 0.0
        %290 = vmatpush.msra.mxu0 0.0
        %291 = vmatpush.msra.mxu0 %v178
        %292 = vmatpush.msra.mxu0 %v177
        %293 = vmatpush.msra.mxu0 %v176
        %294 = vmatpush.msra.mxu0 %v175
        %295 = vmatmul.f32.gmra.mxu0 %v271
        %v296 = vpop.f32.mrf.mxu0
        %v297 = vadd.f32 %v267, %v296
        %298 = vmatmul.f32.gmra.mxu0 %v274
        %v299 = vpop.f32.mrf.mxu0
        %v300 = vadd.f32 %v267, %v299
        %301 = vmatmul.f32.gmra.mxu0 %v277
        %v302 = vpop.f32.mrf.mxu0
        %v303 = vadd.f32 %v267, %v302
        %304 = vdwg.mxu0
        %v305 = vmax.f32 %v297, 0.0
        %v306 = vmax.f32 %v300, 0.0
        %v307 = vmax.f32 %v303, 0.0
        %v308 = vsel %vm269, %v305, 0.0
        %309 = vadd.xlane.f32.xlu0 %v308
        %v310 = vpop.xlane.xlu0 %309
        %v311 = vsel %vm269, %v306, 0.0
        %312 = vadd.xlane.f32.xlu0 %v311
        %v313 = vpop.xlane.xlu0 %312
        %v314 = vsel %vm269, %v307, 0.0
        %315 = vadd.xlane.f32.xlu0 %v314
        %v316 = vpop.xlane.xlu0 %315
        %v317 = vrcp.pop 32.0
        %v318 = vmul.f32 32.0, %v317
        %v319 = vsub.f32 1.0, %v318
        %v320 = vmul.f32 %v317, %v319
        %v321 = vadd.f32 %v317, %v320
        %vm322 = vweird.f32 %v317
        %v323 = vsel %vm322, %v317, %v321
        %v324 = vmul.f32 %v310, %v323
        %v325 = vmul.f32 %v313, %v323
        %v326 = vmul.f32 %v316, %v323
        %v327 = vsub.f32 %v305, %v324
        %v328 = vsub.f32 %v306, %v325
        %v329 = vsub.f32 %v307, %v326
        %v330 = vmul.f32 %v327, %v327
        %v331 = vmul.f32 %v328, %v328
        %v332 = vmul.f32 %v329, %v329
        %v333 = vsel %vm269, %v330, 0.0
        %334 = vadd.xlane.f32.xlu0 %v333
        %v335 = vpop.xlane.xlu0 %334
        %v336 = vsel %vm269, %v331, 0.0
        %337 = vadd.xlane.f32.xlu0 %v336
        %v338 = vpop.xlane.xlu0 %337
        %v339 = vsel %vm269, %v332, 0.0
        %340 = vadd.xlane.f32.xlu0 %v339
        %v341 = vpop.xlane.xlu0 %340
        %v342 = vmul.f32 %v335, %v323
        %v343 = vmul.f32 %v338, %v323
        %v344 = vmul.f32 %v341, %v323
        %v345 = vadd.f32 %v342, 1e-05
        %v346 = vadd.f32 %v343, 1e-05
        %v347 = vadd.f32 %v344, 1e-05
        %v348 = vrsqrt.pop %v345
        %v349 = vmul.f32 %v348, %v345
        %v350 = vmul.f32 %v349, %v348
        %v351 = vmul.f32 0.5, %v350
        %v352 = vsub.f32 1.5, %v351
        %v353 = vmul.f32 %v348, %v352
        %vm354 = vweird.f32 %v345
        %vm355 = vweird.f32 %v348
        %vm356 = vmor %vm354, %vm355
        %v357 = vsel %vm356, %v348, %v353
        %v358 = vrsqrt.pop %v346
        %v359 = vmul.f32 %v358, %v346
        %v360 = vmul.f32 %v359, %v358
        %v361 = vmul.f32 0.5, %v360
        %v362 = vsub.f32 1.5, %v361
        %v363 = vmul.f32 %v358, %v362
        %vm364 = vweird.f32 %v346
        %vm365 = vweird.f32 %v358
        %vm366 = vmor %vm364, %vm365
        %v367 = vsel %vm366, %v358, %v363
        %v368 = vrsqrt.pop %v347
        %v369 = vmul.f32 %v368, %v347
        %v370 = vmul.f32 %v369, %v368
        %v371 = vmul.f32 0.5, %v370
        %v372 = vsub.f32 1.5, %v371
        %v373 = vmul.f32 %v368, %v372
        %vm374 = vweird.f32 %v347
        %vm375 = vweird.f32 %v368
        %vm376 = vmor %vm374, %vm375
        %v377 = vsel %vm376, %v368, %v373
        %v378 = vmul.f32 %v327, %v357
        %v379 = vmul.f32 %v328, %v367
        %v380 = vmul.f32 %v329, %v377
        %v381 = vlaneseq
        %v382 = vshrl.u32 %v381, 7
        %v383 = vadd.s32 %v382, 8
        %v384 = vadd.s32 %v382, 16
        %vm385 = vcmp.lt.s32.totalorder %v382, 8
        %vm386 = vcmp.lt.s32.totalorder %v383, 8
        %vm387 = vcmp.lt.s32.totalorder %v384, 8
        %v388 = vsel %vm385, 1, 0
        %v389 = vsel %vm386, 1, 0
        %v390 = vsel %vm387, 1, 0
        %vm391 = vcmp.eq.s32.totalorder %v388, 1
        %vm392 = vcmp.eq.s32.totalorder %v389, 1
        %vm393 = vcmp.eq.s32.totalorder %v390, 1
        %v394 = vperm.slane %v173, 0
        %v395 = vsel %vm391, %v182, %v394
        %v396 = vsel %vm392, %v182, %v394
        %v397 = vsel %vm393, %v182, %v394
        %401 = vrot.lane.b32.xlu0 %v395, 64
        %v402 = vpop.permute.xlu0 %401
        %403 = vrot.lane.b32.xlu0 %v396, 64
        %v404 = vpop.permute.xlu0 %403
        %405 = vrot.lane.b32.xlu0 %v397, 64
        %v406 = vpop.permute.xlu0 %405
        %v410 = vmul.f32 %v378, %v402
        %v411 = vmul.f32 %v379, %v404
        %v412 = vmul.f32 %v380, %v406
        %413 = vrot.lane.b32.xlu0 %v395, 32
        %v414 = vpop.permute.xlu0 %413
        %415 = vrot.lane.b32.xlu0 %v396, 32
        %v416 = vpop.permute.xlu0 %415
        %417 = vrot.lane.b32.xlu0 %v397, 32
        %v418 = vpop.permute.xlu0 %417
        %v422 = vadd.f32 %v410, %v414
        %v423 = vadd.f32 %v411, %v416
        %v424 = vadd.f32 %v412, %v418
        %v425 = vlaneseq
        %v426 = vand.u32 %v425, 127
        %vm427 = vcmp.eq.s32.totalorder %v382, 0
        %vm428 = vcmp.eq.s32.totalorder %v383, 0
        %s429 = sld [smem:[#allocation3 + %s30]]
        %v430 = vstv %s429
        %v431 = vsel %vm427, %v430, 4294967295
        %v432 = vsel %vm428, %v430, 4294967295
        %vm433 = vcmp.eq.s32.totalorder %v382, 2
        %vm434 = vcmp.eq.s32.totalorder %v383, 2
        %s435 = smul.u32 %s30, 128
        %s436 = sld [smem:[#allocation4 + %s435]]
        %s437 = sadd.s32 %s436, 8
        %v438 = vstv %s437
        %v439 = vsel %vm433, %v438, %v431
        %v440 = vsel %vm434, %v438, %v432
        %vm441 = vcmp.eq.s32.totalorder %v382, 3
        %vm442 = vcmp.eq.s32.totalorder %v383, 3
        %s443 = sadd.s32 %s435, 1
        %s444 = sld [smem:[#allocation4 + %s443]]
        %s445 = sadd.s32 %s444, 8
        %v446 = vstv %s445
        %v447 = vsel %vm441, %v446, %v439
        %v448 = vsel %vm442, %v446, %v440
        %vm449 = vcmp.eq.s32.totalorder %v382, 4
        %vm450 = vcmp.eq.s32.totalorder %v383, 4
        %s451 = sadd.s32 %s435, 2
        %s452 = sld [smem:[#allocation4 + %s451]]
        %s453 = sadd.s32 %s452, 8
        %v454 = vstv %s453
        %v455 = vsel %vm449, %v454, %v447
        %v456 = vsel %vm450, %v454, %v448
        %vm457 = vcmp.eq.s32.totalorder %v382, 5
        %vm458 = vcmp.eq.s32.totalorder %v383, 5
        %s459 = sadd.s32 %s435, 3
        %s460 = sld [smem:[#allocation4 + %s459]]
        %s461 = sadd.s32 %s460, 8
        %v462 = vstv %s461
        %v463 = vsel %vm457, %v462, %v455
        %v464 = vsel %vm458, %v462, %v456
        %vm465 = vcmp.eq.s32.totalorder %v382, 6
        %vm466 = vcmp.eq.s32.totalorder %v383, 6
        %s467 = sadd.s32 %s435, 4
        %s468 = sld [smem:[#allocation4 + %s467]]
        %s469 = sadd.s32 %s468, 8
        %v470 = vstv %s469
        %v471 = vsel %vm465, %v470, %v463
        %v472 = vsel %vm466, %v470, %v464
        %vm473 = vcmp.eq.s32.totalorder %v382, 7
        %vm474 = vcmp.eq.s32.totalorder %v383, 7
        %s475 = sadd.s32 %s435, 5
        %s476 = sld [smem:[#allocation4 + %s475]]
        %s477 = sadd.s32 %s476, 8
        %v478 = vstv %s477
        %v479 = vsel %vm473, %v478, %v471
        %v480 = vsel %vm474, %v478, %v472
        %vm481 = vcmp.eq.s32.totalorder %v382, 8
        %vm482 = vcmp.eq.s32.totalorder %v383, 8
        %s483 = sadd.s32 %s435, 6
        %s484 = sld [smem:[#allocation4 + %s483]]
        %s485 = sadd.s32 %s484, 8
        %v486 = vstv %s485
        %v487 = vsel %vm481, %v486, %v479
        %v488 = vsel %vm482, %v486, %v480
        %vm489 = vcmp.eq.s32.totalorder %v382, 9
        %vm490 = vcmp.eq.s32.totalorder %v383, 9
        %s491 = sadd.s32 %s435, 7
        %s492 = sld [smem:[#allocation4 + %s491]]
        %s493 = sadd.s32 %s492, 8
        %v494 = vstv %s493
        %v495 = vsel %vm489, %v494, %v487
        %v496 = vsel %vm490, %v494, %v488
        %vm497 = vcmp.eq.s32.totalorder %v426, %v495
        %vm498 = vcmp.eq.s32.totalorder %v426, %v496
        %v499 = vsel %vm497, 1.0, 0.0
        %v500 = vsel %vm498, 1.0, 0.0
        %vm501 = vcmp.eq.s32.totalorder %v382, 1
        %vm502 = vcmp.eq.s32.totalorder %v383, 1
        %vm503 = vcmp.lt.s32.totalorder %v426, 8
        %vm504 = vmand %vm501, %vm503
        %vm505 = vmand %vm502, %vm503
        %v506 = vsel %vm504, 0.125, 0.0
        %v507 = vsel %vm505, 0.125, 0.0
        %v508 = vadd.f32 %v499, %v506
        %v509 = vadd.f32 %v500, %v507
        %v511 = vsel %vm232, %v508, 0
        %v514 = vsel %vm232, %v509, 0
        %516 = vmatpush.msra.mxu0 0.0
        %517 = vmatpush.msra.mxu0 0.0
        %518 = vmatpush.msra.mxu0 0.0
        %519 = vmatpush.msra.mxu0 0.0
        %520 = vmatpush.msra.mxu0 0.0
        %521 = vmatpush.msra.mxu0 0.0
        %522 = vmatpush.msra.mxu0 0.0
        %523 = vmatpush.msra.mxu0 0.0
        %524 = vmatpush.msra.mxu0 0.0
        %525 = vmatpush.msra.mxu0 0.0
        %526 = vmatpush.msra.mxu0 0.0
        %527 = vmatpush.msra.mxu0 0.0
        %528 = vmatpush.msra.mxu0 0.0
        %529 = vmatpush.msra.mxu0 %v424
        %530 = vmatpush.msra.mxu0 %v423
        %531 = vmatpush.msra.mxu0 %v422
        %532 = vmatmul.f32.gmra.mxu0 %v511
        %v533 = vpop.f32.mrf.mxu0
        %v534 = vadd.f32 0.0, %v533
        %535 = vmatmul.f32.gmra.mxu0 %v514
        %v536 = vpop.f32.mrf.mxu0
        %v537 = vadd.f32 0.0, %v536
        %538 = vdwg.mxu0
        %v540 = vrot.slane %v534, 1
        %545 = vrot.lane.b32.xlu0 %v175, 96
        %v546 = vpop.permute.xlu0 %545
        %547 = vrot.lane.b32.xlu0 %v176, 96
        %v548 = vpop.permute.xlu0 %547
        %549 = vrot.lane.b32.xlu0 %v177, 96
        %v550 = vpop.permute.xlu0 %549
        %551 = vrot.lane.b32.xlu0 %v178, 96
        %v552 = vpop.permute.xlu0 %551
        %v557 = vsel %vm269, %v540, 0
        %559 = vmatpush.msra.mxu0 0.0
        %560 = vmatpush.msra.mxu0 0.0
        %561 = vmatpush.msra.mxu0 0.0
        %562 = vmatpush.msra.mxu0 0.0
        %563 = vmatpush.msra.mxu0 0.0
        %564 = vmatpush.msra.mxu0 0.0
        %565 = vmatpush.msra.mxu0 0.0
        %566 = vmatpush.msra.mxu0 0.0
        %567 = vmatpush.msra.mxu0 0.0
        %568 = vmatpush.msra.mxu0 0.0
        %569 = vmatpush.msra.mxu0 0.0
        %570 = vmatpush.msra.mxu0 0.0
        %571 = vmatpush.msra.mxu0 %v552
        %572 = vmatpush.msra.mxu0 %v550
        %573 = vmatpush.msra.mxu0 %v548
        %574 = vmatpush.msra.mxu0 %v546
        %575 = vmatmul.f32.gmra.mxu0 %v557
        %v576 = vpop.f32.mrf.mxu0
        %v577 = vadd.f32 %v173, %v576
        %578 = vdwg.mxu0
        %v579 = vmax.f32 %v577, 0.0
        %581 = vrot.lane.b32.xlu0 %v173, 96
        %v582 = vpop.permute.xlu0 %581
        %v584 = vmul.f32 %v579, %v582
        %vm585 = vcmask 253952
        %v586 = vsel %vm585, %v584, 0.0
        %587 = vadd.xlane.f32.xlu0 %v586
        %v588 = vpop.xlane.xlu0 %587
        %v589 = vadd.f32 %v588, %v174
        %vm591 = vcmask 1045504
        %v592 = vrot.slane %v534, 2
        %v593 = vrot.slane %v537, 2
        %v594 = vsel %vm591, %v592, %v593
        %595 = vrot.lane.b32.xlu0 %v175, 64
        %v596 = vpop.permute.xlu0 %595
        %597 = vrot.lane.b32.xlu0 %v176, 64
        %v598 = vpop.permute.xlu0 %597
        %599 = vrot.lane.b32.xlu0 %v177, 64
        %v600 = vpop.permute.xlu0 %599
        %601 = vrot.lane.b32.xlu0 %v178, 64
        %v602 = vpop.permute.xlu0 %601
        %v607 = vsel %vm269, %v594, 0
        %609 = vmatpush.msra.mxu0 0.0
        %610 = vmatpush.msra.mxu0 0.0
        %611 = vmatpush.msra.mxu0 0.0
        %612 = vmatpush.msra.mxu0 0.0
        %613 = vmatpush.msra.mxu0 0.0
        %614 = vmatpush.msra.mxu0 0.0
        %615 = vmatpush.msra.mxu0 0.0
        %616 = vmatpush.msra.mxu0 0.0
        %617 = vmatpush.msra.mxu0 0.0
        %618 = vmatpush.msra.mxu0 0.0
        %619 = vmatpush.msra.mxu0 0.0
        %620 = vmatpush.msra.mxu0 0.0
        %621 = vmatpush.msra.mxu0 %v602
        %622 = vmatpush.msra.mxu0 %v600
        %623 = vmatpush.msra.mxu0 %v598
        %624 = vmatpush.msra.mxu0 %v596
        %625 = vmatmul.f32.gmra.mxu0 %v607
        %v626 = vpop.f32.mrf.mxu0
        %v627 = vadd.f32 0.0, %v626
        %628 = vdwg.mxu0
        %v629 = vperm.slane %v534, 0
        %v630 = vmul.f32 %v627, %v629
        %v631 = vsel %vm269, %v630, 0.0
        %632 = vadd.xlane.f32.xlu0 %v631
        %v633 = vpop.xlane.xlu0 %632
        %v634 = vperm.slane %v534, 1
        %636 = vrot.lane.b32.xlu0 %v634, 32
        %v637 = vpop.permute.xlu0 %636
        %v639 = vmul.f32 %v627, %v637
        %641 = vrot.lane.b32.xlu0 %v639, 96
        %v642 = vpop.permute.xlu0 %641
        %v644 = vsel %vm269, %v642, 0.0
        %645 = vadd.xlane.f32.xlu0 %v644
        %v646 = vpop.xlane.xlu0 %645
        %v647 = vadd.f32 %v633, %v646
        %vm648 = vcmp.eq.s32.totalorder %v426, 0
        %v649 = vsel %vm648, %v647, 0.0
        %vm650 = vcmp.eq.s32.totalorder %v426, 1
        %vm651 = vmand %vm427, %vm650
        %s653 = vtos %v589
        %v654 = vstv %s653
        %v656 = vsel %vm651, %v654, 0.0
        %v657 = vadd.f32 %v649, %v656
        %658 = vst [vmem:[%s170] sm:$0xff] %v657
        %p659 = scmp.lt.s32.totalorder %s30, 7
        %s660 = scalar_select %p659, %s30, 7
        %s661 = smul.addr %s660, 8
        %s662 = scalar_lea.vmem %s4, %s661
        // Predicated region
        $region37: #{dvn_forward.1} parent=27 // pred_check
          %p663 = pneg %p90
        $region38: #{dvn_forward.1} parent=27 // pred_check_branch
          %665 = sbr.rel (%p663) target = $region40
        $region39: #{dvn_forward.1} parent=27 // pred_region
          _
        $region40: #{dvn_forward.1} parent=27 // pred_fallthru
          _
      $region28: #{dvn_forward.1} parent=5 // pred_fallthru
        _
      %p666 = scmp.le.s32.totalorder 2, %s25
      // Predicated region
      $region41: #{dvn_forward.1} parent=5 // pred_check
        %p667 = pneg %p666
      $region42: #{dvn_forward.1} parent=5 // pred_check_branch
        %669 = sbr.rel (%p667) target = $region44
      $region43: #{dvn_forward.1} parent=5 // pred_region
        %s670 = ssub.s32 %s25, 2
        // Predicated region
        $region45: #{dvn_forward.1} parent=43 // pred_check
          %p671 = pneg %p96
        $region46: #{dvn_forward.1} parent=43 // pred_check_branch
          %673 = sbr.rel (%p671) target = $region48
        $region47: #{dvn_forward.1} parent=43 // pred_region
          %p674 = scmp.lt.s32.totalorder %s31, 7
          %s675 = scalar_select %p674, %s31, 7
          %s676 = smul.addr %s675, 8
          %s677 = scalar_lea.vmem %s4, %s676
        $region48: #{dvn_forward.1} parent=43 // pred_fallthru
          _
      $region44: #{dvn_forward.1} parent=5 // pred_fallthru
        _
    $region6: #{dvn_forward.1} parent=1 // loop_footer
      %s29 = sadd.s32 1, %s25
    $region7: #{dvn_forward.1} parent=1 // loop_footer_branch
      %24 = sbr.rel target = $region3
    $region8: #{dvn_forward.1} parent=1 // loop_exit
      _
    %678 = vsyncpa [#allocation6], 1
    %s679 = scalar_lea.sflag [#allocation6], 1
    %680 = vsyncpa %s679, 1
    %681 = vsyncpa [#allocation8], 1

</llo_original>
